<compile_context>
chip_gen: v7x
topology: tpu7x:2x2x1
jax: 0.10.0
libtpu: 0.0.40
codegen_flags: <defaults>
</compile_context>

<pallas_src>
import jax
import jax.numpy as jnp
from jax.experimental import pallas as pl
from jax.experimental.pallas import tpu as pltpu


def _round_up(x, m):
    return ((x + m - 1) // m) * m


def _cdiv(a, b):
    return -(-a // b)


def _critic_kernel(state_ref, action_ref,
                   w1s_ref, w1a_ref, b1_ref,
                   w2a_ref, b2a_ref, w2b_ref, b2b_ref,
                   w3a_ref, w3b_ref, b3_ref,
                   q_ref):
    """Fused twin-head MLP: 6 matmuls + 4 ReLUs per batch tile, all in VMEM.

    Dot operands are cast to the weight dtype (bf16 or f32); accumulation and
    all elementwise math (bias add, ReLU) stay float32.
    """
    HP = w2a_ref.shape[0]

    def mm(x, w_ref):
        return jnp.dot(x.astype(w_ref.dtype), w_ref[...],
                       preferred_element_type=jnp.float32)

    # Layer 1: both heads fused along the lane axis (width 2*HP).
    h = mm(state_ref[...], w1s_ref) + mm(action_ref[...], w1a_ref) + b1_ref[...]
    h = jnp.maximum(h, 0.0)

    # Layer 2: heads computed separately (no block-diagonal zero FLOPs).
    # HP is a multiple of 128, so these slices are lane-tile aligned.
    ha = jnp.maximum(mm(h[:, :HP], w2a_ref) + b2a_ref[...], 0.0)
    hb = jnp.maximum(mm(h[:, HP:], w2b_ref) + b2b_ref[...], 0.0)

    # Layer 3: both heads land in one lane-dense (TB, 128) slab
    # (q1 -> lane 0, q2 -> lane 1) for unmasked full-vreg stores.
    q_ref[...] = (mm(ha, w3a_ref) + mm(hb, w3b_ref)
                  + b3_ref[...]).astype(q_ref.dtype)


def fuse_params(params, state_dim, *, use_bf16=True):
    """Fuse the two Q-heads into one kernel-friendly weight set.

    Call this ONCE per parameter update (not per forward) -- it launches a few
    XLA pad/concat ops and materializes the fused weights.
    """
    H = params["w12"].shape[0]
    D = params["w11"].shape[0]
    HP = _round_up(H, 128)       # per-head hidden width, padded to full lanes
    OUT = 128                    # lane-dense output slab width

    def pad2(w, r, c):
        return jnp.pad(w, ((0, r - w.shape[0]), (0, c - w.shape[1])))

    # Layer 1: concat heads along lanes, each padded H -> HP.
    w1 = jnp.concatenate([pad2(params["w11"], D, HP),
                          pad2(params["w21"], D, HP)], axis=1)        # (D, 2HP)
    b1 = jnp.concatenate([pad2(params["b11"], 1, HP),
                          pad2(params["b21"], 1, HP)], axis=1)        # (1, 2HP)

    # Layer 2: kept separate per head.
    w2a = pad2(params["w12"], HP, HP)
    b2a = pad2(params["b12"], 1, HP)
    w2b = pad2(params["w22"], HP, HP)
    b2b = pad2(params["b22"], 1, HP)

    # Layer 3: head 1 -> lane 0, head 2 -> lane 1 of a 128-wide slab.
    w3a = jnp.zeros((HP, OUT), jnp.float32).at[:H, 0].set(params["w13"][:, 0])
    w3b = jnp.zeros((HP, OUT), jnp.float32).at[:H, 1].set(params["w23"][:, 0])
    b3 = jnp.zeros((1, OUT), jnp.float32)
    b3 = b3.at[0, 0].set(params["b13"][0, 0]).at[0, 1].set(params["b23"][0, 0])

    wdt = jnp.bfloat16 if use_bf16 else jnp.float32
    return {
        "w1s": w1[:state_dim].astype(wdt),     # (S, 2HP)
        "w1a": w1[state_dim:].astype(wdt),     # (A, 2HP)
        "b1": b1,                              # biases stay float32
        "w2a": w2a.astype(wdt), "b2a": b2a,
        "w2b": w2b.astype(wdt), "b2b": b2b,
        "w3a": w3a.astype(wdt), "w3b": w3b.astype(wdt), "b3": b3,
    }


def critic_forward(state, action, fused, *, block_rows=4096):
    """Returns (q1, q2), each (B, 1) float32. `fused` comes from fuse_params."""
    B, state_dim = state.shape
    action_dim = action.shape[1]
    HP2 = fused["b1"].shape[1]      # 2 * HP
    HP = HP2 // 2
    OUT = fused["b3"].shape[1]      # 128

    # Stream the activation inputs in the same dtype as the weights
    # (halves per-step DMA bytes on the bf16 path).
    in_dtype = fused["w1s"].dtype
    state = state.astype(in_dtype)
    action = action.astype(in_dtype)

    # Balanced batch tiles: as few, as large as possible; >= 2 (and even) when
    # B allows so the "parallel" batch axis feeds both v7x TensorCores.
    num_tiles = max(1, _cdiv(B, block_rows))
    if B >= 16:
        num_tiles = max(num_tiles, 2)
        if num_tiles % 2:
            num_tiles += 1
    TB = _round_up(_cdiv(B, num_tiles), 8)
    B_pad = num_tiles * TB
    if B_pad != B:
        pad = B_pad - B
        state = jnp.pad(state, ((0, pad), (0, 0)))
        action = jnp.pad(action, ((0, pad), (0, 0)))

    grid = (num_tiles,)
    row_map = lambda i: (i, 0)       # activation / output tiles march over batch
    res_map = lambda i: (0, 0)       # weights & biases stay VMEM-resident

    in_specs = [
        pl.BlockSpec((TB, state_dim), row_map),
        pl.BlockSpec((TB, action_dim), row_map),
        pl.BlockSpec((state_dim, HP2), res_map),
        pl.BlockSpec((action_dim, HP2), res_map),
        pl.BlockSpec((1, HP2), res_map),
        pl.BlockSpec((HP, HP), res_map),
        pl.BlockSpec((1, HP), res_map),
        pl.BlockSpec((HP, HP), res_map),
        pl.BlockSpec((1, HP), res_map),
        pl.BlockSpec((HP, OUT), res_map),
        pl.BlockSpec((HP, OUT), res_map),
        pl.BlockSpec((1, OUT), res_map),
    ]
    out_specs = pl.BlockSpec((TB, OUT), row_map)
    out_shape = jax.ShapeDtypeStruct((B_pad, OUT), jnp.float32)

    # Scheduler hints.
    w_bytes = 2 if in_dtype == jnp.bfloat16 else 4
    weight_bytes = (w_bytes * ((state_dim + action_dim) * HP2
                               + 2 * HP * HP + 2 * HP * OUT)
                    + 4 * (HP2 + 2 * HP + OUT))
    flops = 2 * B_pad * ((state_dim + action_dim) * HP2
                         + 2 * HP * HP + 2 * HP * OUT)
    bytes_accessed = (w_bytes * B_pad * (state_dim + action_dim)
                      + 4 * B_pad * OUT + weight_bytes)
    cost = pl.CostEstimate(flops=int(flops), transcendentals=0,
                           bytes_accessed=int(bytes_accessed))

    # Explicit VMEM budget: double-buffered input/output tiles, 2x weights,
    # full-tile intermediates (h1, ha, hb) in f32, 1.5x factor + 8 MiB headroom.
    act_bytes = (2 * TB * (state_dim + action_dim) * w_bytes   # streamed inputs
                 + 2 * TB * OUT * 4                            # output slab
                 + 4 * TB * HP2                                # h1
                 + 2 * 4 * TB * HP)                            # ha + hb
    vmem_limit = min(int(1.5 * (act_bytes + 2 * weight_bytes)) + (8 << 20),
                     64 << 20)

    q = pl.pallas_call(
        _critic_kernel,
        grid=grid,
        in_specs=in_specs,
        out_specs=out_specs,
        out_shape=out_shape,
        compiler_params=pltpu.CompilerParams(
            dimension_semantics=("parallel",),
            vmem_limit_bytes=vmem_limit),
        cost_estimate=cost,
    )(state, action,
      fused["w1s"], fused["w1a"], fused["b1"],
      fused["w2a"], fused["b2a"], fused["w2b"], fused["b2b"],
      fused["w3a"], fused["w3b"], fused["b3"])

    return q[:B, 0:1], q[:B, 1:2]


def init_params(key, state_dim, action_dim, hidden_dim):
    """Deterministic init mimicking PyTorch Linear default: U(-1/sqrt(fan_in), +)."""
    D = state_dim + action_dim
    shapes = {
        # q1
        "w11": (D, hidden_dim), "b11": (1, hidden_dim),
        "w12": (hidden_dim, hidden_dim), "b12": (1, hidden_dim),
        "w13": (hidden_dim, 1), "b13": (1, 1),
        # q2
        "w21": (D, hidden_dim), "b21": (1, hidden_dim),
        "w22": (hidden_dim, hidden_dim), "b22": (1, hidden_dim),
        "w23": (hidden_dim, 1), "b23": (1, 1),
    }
    fan_in = {
        "w11": D, "b11": D, "w12": hidden_dim, "b12": hidden_dim,
        "w13": hidden_dim, "b13": hidden_dim,
        "w21": D, "b21": D, "w22": hidden_dim, "b22": hidden_dim,
        "w23": hidden_dim, "b23": hidden_dim,
    }
    params = {}
    keys = jax.random.split(key, len(shapes))
    for k_rng, (name, shp) in zip(keys, sorted(shapes.items())):
        bound = 1.0 / jnp.sqrt(jnp.float32(fan_in[name]))
        params[name] = jax.random.uniform(
            k_rng, shp, dtype=jnp.float32, minval=-bound, maxval=bound)
    return params


def _reference_forward(state, action, p):
    """Pure-JAX reference (un-fused twin heads) for a sanity check."""
    sa = jnp.concatenate([state, action], axis=1)

    def head(w1, b1, w2, b2, w3, b3):
        h = jnp.maximum(sa @ w1 + b1, 0.0)
        h = jnp.maximum(h @ w2 + b2, 0.0)
        return h @ w3 + b3

    q1 = head(p["w11"], p["b11"], p["w12"], p["b12"], p["w13"], p["b13"])
    q2 = head(p["w21"], p["b21"], p["w22"], p["b22"], p["w23"], p["b23"])
    return q1, q2


if __name__ == "__main__":
    key = jax.random.PRNGKey(0)
    k_state, k_action, k_params, k_state2, k_action2 = jax.random.split(key, 5)

    # Small shapes consistent with the module.
    batch = 2
    state_dim = 8
    action_dim = 4
    hidden_dim = 32

    state = jax.random.normal(k_state, (batch, state_dim), dtype=jnp.float32)
    action = jax.random.normal(k_action, (batch, action_dim), dtype=jnp.float32)
    params = init_params(k_params, state_dim, action_dim, hidden_dim)

    # --- f32 weight path: tight tolerance, single-tile grid. ---
    fused_f32 = fuse_params(params, state_dim, use_bf16=False)
    q1, q2 = critic_forward(state, action, fused_f32)
    jax.block_until_ready((q1, q2))

    q1_ref, q2_ref = _reference_forward(state, action, params)
    assert q1.shape == (batch, 1) and q2.shape == (batch, 1)
    assert jnp.allclose(q1, q1_ref, atol=1e-4, rtol=1e-4)
    assert jnp.allclose(q2, q2_ref, atol=1e-4, rtol=1e-4)

    # --- bf16 MXU path: multi-tile parallel grid + batch padding. ---
    batch2 = 600
    state2 = jax.random.normal(k_state2, (batch2, state_dim), dtype=jnp.float32)
    action2 = jax.random.normal(k_action2, (batch2, action_dim), dtype=jnp.float32)
    fused_bf16 = fuse_params(params, state_dim, use_bf16=True)   # fused once
    q1b, q2b = critic_forward(state2, action2, fused_bf16, block_rows=256)
    jax.block_until_ready((q1b, q2b))

    q1b_ref, q2b_ref = _reference_forward(state2, action2, params)
    assert q1b.shape == (batch2, 1) and q2b.shape == (batch2, 1)
    assert jnp.allclose(q1b, q1b_ref, atol=2e-2, rtol=2e-2)
    assert jnp.allclose(q2b, q2b_ref, atol=2e-2, rtol=2e-2)

    print("KERNEL_OK")
</pallas_src>

<mosaic_0001>
module attributes {stable_mosaic.version = 11 : i64} {
  func.func @_critic_kernel(%arg0: i32, %arg1: memref<8x8xf32, #tpu.memory_space<vmem>>, %arg2: memref<8x4xf32, #tpu.memory_space<vmem>>, %arg3: memref<8x256xf32, #tpu.memory_space<vmem>>, %arg4: memref<4x256xf32, #tpu.memory_space<vmem>>, %arg5: memref<1x256xf32, #tpu.memory_space<vmem>>, %arg6: memref<128x128xf32, #tpu.memory_space<vmem>>, %arg7: memref<1x128xf32, #tpu.memory_space<vmem>>, %arg8: memref<128x128xf32, #tpu.memory_space<vmem>>, %arg9: memref<1x128xf32, #tpu.memory_space<vmem>>, %arg10: memref<128x128xf32, #tpu.memory_space<vmem>>, %arg11: memref<128x128xf32, #tpu.memory_space<vmem>>, %arg12: memref<1x128xf32, #tpu.memory_space<vmem>>, %arg13: memref<8x128xf32, #tpu.memory_space<vmem>>) attributes {dimension_semantics = [#tpu.dimension_semantics<parallel>], iteration_bounds = array<i64: 1>, scalar_prefetch = 0 : i64, scratch_operands = 0 : i64, tpu.core_type = #tpu.core_type<tc>, window_params = [{transform_indices = @transform_0, window_bounds = array<i64: 8, 8>}, {transform_indices = @transform_1, window_bounds = array<i64: 8, 4>}, {pipeline_mode = #tpu.pipeline_mode<synchronous>, transform_indices = @transform_2, window_bounds = array<i64: 8, 256>}, {pipeline_mode = #tpu.pipeline_mode<synchronous>, transform_indices = @transform_3, window_bounds = array<i64: 4, 256>}, {pipeline_mode = #tpu.pipeline_mode<synchronous>, transform_indices = @transform_4, window_bounds = array<i64: 1, 256>}, {pipeline_mode = #tpu.pipeline_mode<synchronous>, transform_indices = @transform_5, window_bounds = array<i64: 128, 128>}, {pipeline_mode = #tpu.pipeline_mode<synchronous>, transform_indices = @transform_6, window_bounds = array<i64: 1, 128>}, {pipeline_mode = #tpu.pipeline_mode<synchronous>, transform_indices = @transform_7, window_bounds = array<i64: 128, 128>}, {pipeline_mode = #tpu.pipeline_mode<synchronous>, transform_indices = @transform_8, window_bounds = array<i64: 1, 128>}, {pipeline_mode = #tpu.pipeline_mode<synchronous>, transform_indices = @transform_9, window_bounds = array<i64: 128, 128>}, {pipeline_mode = #tpu.pipeline_mode<synchronous>, transform_indices = @transform_10, window_bounds = array<i64: 128, 128>}, {pipeline_mode = #tpu.pipeline_mode<synchronous>, transform_indices = @transform_11, window_bounds = array<i64: 1, 128>}, {transform_indices = @transform_12, window_bounds = array<i64: 8, 128>}]} {
    %c0 = arith.constant 0 : index
    %c0_0 = arith.constant 0 : index
    %0 = vector.load %arg1[%c0, %c0_0] : memref<8x8xf32, #tpu.memory_space<vmem>>, vector<8x8xf32>
    %c0_1 = arith.constant 0 : index
    %c0_2 = arith.constant 0 : index
    %1 = vector.load %arg3[%c0_1, %c0_2] : memref<8x256xf32, #tpu.memory_space<vmem>>, vector<8x256xf32>
    %cst = arith.constant dense<0.000000e+00> : vector<8x256xf32>
    %2 = tpu.matmul %0, %1, %cst {dimension_numbers = #tpu.dot_dimension_numbers<[1], [0], [0], [1], [0, 0, 1, 1], [], []>} : vector<8x8xf32>, vector<8x256xf32>, vector<8x256xf32> -> vector<8x256xf32>
    %c0_3 = arith.constant 0 : index
    %c0_4 = arith.constant 0 : index
    %3 = vector.load %arg2[%c0_3, %c0_4] : memref<8x4xf32, #tpu.memory_space<vmem>>, vector<8x4xf32>
    %c0_5 = arith.constant 0 : index
    %c0_6 = arith.constant 0 : index
    %4 = vector.load %arg4[%c0_5, %c0_6] : memref<4x256xf32, #tpu.memory_space<vmem>>, vector<4x256xf32>
    %cst_7 = arith.constant dense<0.000000e+00> : vector<8x256xf32>
    %5 = tpu.matmul %3, %4, %cst_7 {dimension_numbers = #tpu.dot_dimension_numbers<[1], [0], [0], [1], [0, 0, 1, 1], [], []>} : vector<8x4xf32>, vector<4x256xf32>, vector<8x256xf32> -> vector<8x256xf32>
    %6 = arith.addf %2, %5 : vector<8x256xf32>
    %c0_8 = arith.constant 0 : index
    %c0_9 = arith.constant 0 : index
    %7 = vector.load %arg5[%c0_8, %c0_9] : memref<1x256xf32, #tpu.memory_space<vmem>>, vector<1x256xf32>
    %8 = vector.broadcast %7 : vector<1x256xf32> to vector<8x256xf32>
    %9 = arith.addf %6, %8 : vector<8x256xf32>
    %cst_10 = arith.constant 0.000000e+00 : f32
    %10 = vector.broadcast %cst_10 : f32 to vector<8x256xf32>
    %11 = arith.maximumf %9, %10 : vector<8x256xf32>
    %12 = vector.extract_strided_slice %11 {offsets = [0, 0], sizes = [8, 128], strides = [1, 1]} : vector<8x256xf32> to vector<8x128xf32>
    %c0_11 = arith.constant 0 : index
    %c0_12 = arith.constant 0 : index
    %13 = vector.load %arg6[%c0_11, %c0_12] : memref<128x128xf32, #tpu.memory_space<vmem>>, vector<128x128xf32>
    %cst_13 = arith.constant dense<0.000000e+00> : vector<8x128xf32>
    %14 = tpu.matmul %12, %13, %cst_13 {dimension_numbers = #tpu.dot_dimension_numbers<[1], [0], [0], [1], [0, 0, 1, 1], [], []>} : vector<8x128xf32>, vector<128x128xf32>, vector<8x128xf32> -> vector<8x128xf32>
    %c0_14 = arith.constant 0 : index
    %c0_15 = arith.constant 0 : index
    %15 = vector.load %arg7[%c0_14, %c0_15] : memref<1x128xf32, #tpu.memory_space<vmem>>, vector<1x128xf32>
    %16 = vector.broadcast %15 : vector<1x128xf32> to vector<8x128xf32>
    %17 = arith.addf %14, %16 : vector<8x128xf32>
    %cst_16 = arith.constant 0.000000e+00 : f32
    %18 = vector.broadcast %cst_16 : f32 to vector<8x128xf32>
    %19 = arith.maximumf %17, %18 : vector<8x128xf32>
    %20 = vector.extract_strided_slice %11 {offsets = [0, 128], sizes = [8, 128], strides = [1, 1]} : vector<8x256xf32> to vector<8x128xf32>
    %c0_17 = arith.constant 0 : index
    %c0_18 = arith.constant 0 : index
    %21 = vector.load %arg8[%c0_17, %c0_18] : memref<128x128xf32, #tpu.memory_space<vmem>>, vector<128x128xf32>
    %cst_19 = arith.constant dense<0.000000e+00> : vector<8x128xf32>
    %22 = tpu.matmul %20, %21, %cst_19 {dimension_numbers = #tpu.dot_dimension_numbers<[1], [0], [0], [1], [0, 0, 1, 1], [], []>} : vector<8x128xf32>, vector<128x128xf32>, vector<8x128xf32> -> vector<8x128xf32>
    %c0_20 = arith.constant 0 : index
    %c0_21 = arith.constant 0 : index
    %23 = vector.load %arg9[%c0_20, %c0_21] : memref<1x128xf32, #tpu.memory_space<vmem>>, vector<1x128xf32>
    %24 = vector.broadcast %23 : vector<1x128xf32> to vector<8x128xf32>
    %25 = arith.addf %22, %24 : vector<8x128xf32>
    %cst_22 = arith.constant 0.000000e+00 : f32
    %26 = vector.broadcast %cst_22 : f32 to vector<8x128xf32>
    %27 = arith.maximumf %25, %26 : vector<8x128xf32>
    %c0_23 = arith.constant 0 : index
    %c0_24 = arith.constant 0 : index
    %28 = vector.load %arg10[%c0_23, %c0_24] : memref<128x128xf32, #tpu.memory_space<vmem>>, vector<128x128xf32>
    %cst_25 = arith.constant dense<0.000000e+00> : vector<8x128xf32>
    %29 = tpu.matmul %19, %28, %cst_25 {dimension_numbers = #tpu.dot_dimension_numbers<[1], [0], [0], [1], [0, 0, 1, 1], [], []>} : vector<8x128xf32>, vector<128x128xf32>, vector<8x128xf32> -> vector<8x128xf32>
    %c0_26 = arith.constant 0 : index
    %c0_27 = arith.constant 0 : index
    %30 = vector.load %arg11[%c0_26, %c0_27] : memref<128x128xf32, #tpu.memory_space<vmem>>, vector<128x128xf32>
    %cst_28 = arith.constant dense<0.000000e+00> : vector<8x128xf32>
    %31 = tpu.matmul %27, %30, %cst_28 {dimension_numbers = #tpu.dot_dimension_numbers<[1], [0], [0], [1], [0, 0, 1, 1], [], []>} : vector<8x128xf32>, vector<128x128xf32>, vector<8x128xf32> -> vector<8x128xf32>
    %32 = arith.addf %29, %31 : vector<8x128xf32>
    %c0_29 = arith.constant 0 : index
    %c0_30 = arith.constant 0 : index
    %33 = vector.load %arg12[%c0_29, %c0_30] : memref<1x128xf32, #tpu.memory_space<vmem>>, vector<1x128xf32>
    %34 = vector.broadcast %33 : vector<1x128xf32> to vector<8x128xf32>
    %35 = arith.addf %32, %34 : vector<8x128xf32>
    %c0_31 = arith.constant 0 : index
    %c0_32 = arith.constant 0 : index
    %36 = vector.load %arg13[%c0_31, %c0_32] : memref<8x128xf32, #tpu.memory_space<vmem>>, vector<8x128xf32>
    tpu.vector_store %arg13[%c0_31, %c0_32], %35 {strides = array<i32>} : memref<8x128xf32, #tpu.memory_space<vmem>>, vector<8x128xf32>,
    return
  }
  func.func @transform_0(%arg0: i32) -> (i32, i32) {
    %c0_i32 = arith.constant 0 : i32
    %c0_i32_0 = arith.constant 0 : i32
    return %arg0, %c0_i32 : i32, i32
  }
  func.func @transform_1(%arg0: i32) -> (i32, i32) {
    %c0_i32 = arith.constant 0 : i32
    %c0_i32_0 = arith.constant 0 : i32
    return %arg0, %c0_i32 : i32, i32
  }
  func.func @transform_2(%arg0: i32) -> (i32, i32) {
    %c0_i32 = arith.constant 0 : i32
    %c0_i32_0 = arith.constant 0 : i32
    %c0_i32_1 = arith.constant 0 : i32
    return %c0_i32, %c0_i32_0 : i32, i32
  }
  func.func @transform_3(%arg0: i32) -> (i32, i32) {
    %c0_i32 = arith.constant 0 : i32
    %c0_i32_0 = arith.constant 0 : i32
    %c0_i32_1 = arith.constant 0 : i32
    return %c0_i32, %c0_i32_0 : i32, i32
  }
  func.func @transform_4(%arg0: i32) -> (i32, i32) {
    %c0_i32 = arith.constant 0 : i32
    %c0_i32_0 = arith.constant 0 : i32
    %c0_i32_1 = arith.constant 0 : i32
    return %c0_i32, %c0_i32_0 : i32, i32
  }
  func.func @transform_5(%arg0: i32) -> (i32, i32) {
    %c0_i32 = arith.constant 0 : i32
    %c0_i32_0 = arith.constant 0 : i32
    %c0_i32_1 = arith.constant 0 : i32
    return %c0_i32, %c0_i32_0 : i32, i32
  }
  func.func @transform_6(%arg0: i32) -> (i32, i32) {
    %c0_i32 = arith.constant 0 : i32
    %c0_i32_0 = arith.constant 0 : i32
    %c0_i32_1 = arith.constant 0 : i32
    return %c0_i32, %c0_i32_0 : i32, i32
  }
  func.func @transform_7(%arg0: i32) -> (i32, i32) {
    %c0_i32 = arith.constant 0 : i32
    %c0_i32_0 = arith.constant 0 : i32
    %c0_i32_1 = arith.constant 0 : i32
    return %c0_i32, %c0_i32_0 : i32, i32
  }
  func.func @transform_8(%arg0: i32) -> (i32, i32) {
    %c0_i32 = arith.constant 0 : i32
    %c0_i32_0 = arith.constant 0 : i32
    %c0_i32_1 = arith.constant 0 : i32
    return %c0_i32, %c0_i32_0 : i32, i32
  }
  func.func @transform_9(%arg0: i32) -> (i32, i32) {
    %c0_i32 = arith.constant 0 : i32
    %c0_i32_0 = arith.constant 0 : i32
    %c0_i32_1 = arith.constant 0 : i32
    return %c0_i32, %c0_i32_0 : i32, i32
  }
  func.func @transform_10(%arg0: i32) -> (i32, i32) {
    %c0_i32 = arith.constant 0 : i32
    %c0_i32_0 = arith.constant 0 : i32
    %c0_i32_1 = arith.constant 0 : i32
    return %c0_i32, %c0_i32_0 : i32, i32
  }
  func.func @transform_11(%arg0: i32) -> (i32, i32) {
    %c0_i32 = arith.constant 0 : i32
    %c0_i32_0 = arith.constant 0 : i32
    %c0_i32_1 = arith.constant 0 : i32
    return %c0_i32, %c0_i32_0 : i32, i32
  }
  func.func @transform_12(%arg0: i32) -> (i32, i32) {
    %c0_i32 = arith.constant 0 : i32
    %c0_i32_0 = arith.constant 0 : i32
    return %arg0, %c0_i32 : i32, i32
  }
}

</mosaic_0001>

<llo_original>
// kernel: tpu_custom_call.1
$region0: #{tpu_custom_call.1}
  #allocation0 [shape = 'u32[]', space=smem, size = 0x4, offset = 0x4, fixed_abs, tag = 'smem constant byte address 0x4 - core index']
  #allocation1 [shape = 'u32[144,128]{1,0:T(1,128)}', space=vmem, size = 0x12000, scoped, tag = 'internal scratch']
  %s0 = inlined_call_operand.hbm [shape: f32[8,8], index: 0, kind: input, shape index: {}]
  %s1 = inlined_call_operand.vmem [shape: f32[8,4], index: 1, kind: input, shape index: {}]
  %s2 = inlined_call_operand.vmem [shape: f32[8,256], index: 2, kind: input, shape index: {}]
  %s3 = inlined_call_operand.hbm [shape: f32[4,256], index: 3, kind: input, shape index: {}]
  %s4 = inlined_call_operand.vmem [shape: f32[1,256], index: 4, kind: input, shape index: {}]
  %s5 = inlined_call_operand.hbm [shape: f32[128,128], index: 5, kind: input, shape index: {}]
  %s6 = inlined_call_operand.vmem [shape: f32[1,128], index: 6, kind: input, shape index: {}]
  %s7 = inlined_call_operand.hbm [shape: f32[128,128], index: 7, kind: input, shape index: {}]
  %s8 = inlined_call_operand.vmem [shape: f32[1,128], index: 8, kind: input, shape index: {}]
  %s9 = inlined_call_operand.hbm [shape: f32[128,128], index: 9, kind: input, shape index: {}]
  %s10 = inlined_call_operand.hbm [shape: f32[128,128], index: 10, kind: input, shape index: {}]
  %s11 = inlined_call_operand.vmem [shape: f32[1,128], index: 11, kind: input, shape index: {}]
  %s12 = inlined_call_operand.hbm [shape: f32[8,128], index: 12, kind: output, shape index: {}]
  %s13 = sld [smem:[#allocation0]]
  $region82: #{tpu_custom_call.1} parent=0
    _
  %s15 = ssub.s32 1, %s13
  %s16 = scalar_select 0, %s15, %s13
  $region1: #{tpu_custom_call.1} parent=0
    #allocation2 [shape = 'u8[4096]{0}', space=vmem, size = 0x1000, scoped, tag = 'input window, operand 0, single buffered']
    #allocation3 [shape = 's32[1]{0}', space=sflag, size = 0x4, scoped, tag = 'scoped memory for tpu_custom_call.1']
    #allocation4 [shape = 's32[1]{0}', space=sflag, size = 0x4, scoped, tag = 'scoped memory for tpu_custom_call.1']
    #allocation5 [shape = 'u8[4096]{0}', space=vmem, size = 0x1000, scoped, tag = 'input window, operand 3, single buffered']
    #allocation6 [shape = 's32[1]{0}', space=sflag, size = 0x4, scoped, tag = 'scoped memory for tpu_custom_call.1']
    #allocation7 [shape = 'u8[65536]{0}', space=vmem, size = 0x10000, scoped, tag = 'input window, operand 5, single buffered']
    #allocation8 [shape = 'u8[65536]{0}', space=vmem, size = 0x10000, scoped, tag = 'input window, operand 7, single buffered']
    #allocation9 [shape = 's32[1]{0}', space=sflag, size = 0x4, scoped, tag = 'scoped memory for tpu_custom_call.1']
    #allocation10 [shape = 'u8[65536]{0}', space=vmem, size = 0x10000, scoped, tag = 'input window, operand 9, single buffered']
    #allocation11 [shape = 'u8[65536]{0}', space=vmem, size = 0x10000, scoped, tag = 'input window, operand 10, single buffered']
    #allocation12 [shape = 's32[1]{0}', space=sflag, size = 0x4, scoped, tag = 'scoped memory for tpu_custom_call.1']
    #allocation13 [shape = 'u8[4096]{0}', space=vmem, size = 0x1000, scoped, tag = 'output window, operand 0, single buffered']
    %17 = vsyncpa [#allocation3], 0
    %18 = vsyncpa [#allocation6], 0
    %19 = vsyncpa [#allocation9], 0
    %20 = vsyncpa [#allocation12], 0
    %21 = vsyncpa [#allocation4], 0
    // Predicated region
    $region2: #{tpu_custom_call.1} parent=1 // pred_check
      _
    $region3: #{tpu_custom_call.1} parent=1 // pred_check_branch
      %23 = sbr.rel (0) target = $region5
    $region4: #{tpu_custom_call.1} parent=1 // pred_region
      %s25 = ssub.s32 128, 128
      %26 = vsyncadd [#allocation3], %s25
      %s28 = sshll.u32 [#allocation2], 4
      %s29 = int_to_ptr.vmem [resolvable:$true] %s28
      %31 = dma.hbm_to_vmem [thread:$0]  %s0, 128, %s29, [#allocation3]
    $region5: #{tpu_custom_call.1} parent=1 // pred_fallthru
      _
    // Predicated region
    $region6: #{tpu_custom_call.1} parent=1 // pred_check
      _
    $region7: #{tpu_custom_call.1} parent=1 // pred_check_branch
      %33 = sbr.rel (0) target = $region9
    $region8: #{tpu_custom_call.1} parent=1 // pred_region
      _
    $region9: #{tpu_custom_call.1} parent=1 // pred_fallthru
      _
    // Predicated region
    $region10: #{tpu_custom_call.1} parent=1 // pred_check
      _
    $region11: #{tpu_custom_call.1} parent=1 // pred_check_branch
      %35 = sbr.rel (0) target = $region13
    $region12: #{tpu_custom_call.1} parent=1 // pred_region
      _
    $region13: #{tpu_custom_call.1} parent=1 // pred_fallthru
      _
    // Predicated region
    $region14: #{tpu_custom_call.1} parent=1 // pred_check
      _
    $region15: #{tpu_custom_call.1} parent=1 // pred_check_branch
      %37 = sbr.rel (0) target = $region17
    $region16: #{tpu_custom_call.1} parent=1 // pred_region
      %s39 = ssub.s32 128, 128
      %40 = vsyncadd [#allocation6], %s39
      %s42 = sshll.u32 [#allocation5], 4
      %s43 = int_to_ptr.vmem [resolvable:$true] %s42
      %45 = dma.hbm_to_vmem [thread:$0]  %s3, 128, %s43, [#allocation6]
    $region17: #{tpu_custom_call.1} parent=1 // pred_fallthru
      _
    // Predicated region
    $region18: #{tpu_custom_call.1} parent=1 // pred_check
      _
    $region19: #{tpu_custom_call.1} parent=1 // pred_check_branch
      %47 = sbr.rel (0) target = $region21
    $region20: #{tpu_custom_call.1} parent=1 // pred_region
      _
    $region21: #{tpu_custom_call.1} parent=1 // pred_fallthru
      _
    // Predicated region
    $region22: #{tpu_custom_call.1} parent=1 // pred_check
      _
    $region23: #{tpu_custom_call.1} parent=1 // pred_check_branch
      %49 = sbr.rel (0) target = $region25
    $region24: #{tpu_custom_call.1} parent=1 // pred_region
      %s51 = ssub.s32 2048, 2048
      %52 = vsyncadd [#allocation6], %s51
      %s53 = sshll.u32 [#allocation7], 4
      %s54 = int_to_ptr.vmem [resolvable:$true] %s53
      %59 = dma.hbm_to_vmem [thread:$0]  %s5, 2048, %s54, [#allocation6], 128, 128, 8
    $region25: #{tpu_custom_call.1} parent=1 // pred_fallthru
      _
    // Predicated region
    $region26: #{tpu_custom_call.1} parent=1 // pred_check
      _
    $region27: #{tpu_custom_call.1} parent=1 // pred_check_branch
      %61 = sbr.rel (0) target = $region29
    $region28: #{tpu_custom_call.1} parent=1 // pred_region
      _
    $region29: #{tpu_custom_call.1} parent=1 // pred_fallthru
      _
    // Predicated region
    $region30: #{tpu_custom_call.1} parent=1 // pred_check
      _
    $region31: #{tpu_custom_call.1} parent=1 // pred_check_branch
      %63 = sbr.rel (0) target = $region33
    $region32: #{tpu_custom_call.1} parent=1 // pred_region
      %s65 = ssub.s32 2048, 2048
      %66 = vsyncadd [#allocation9], %s65
      %s67 = sshll.u32 [#allocation8], 4
      %s68 = int_to_ptr.vmem [resolvable:$true] %s67
      %73 = dma.hbm_to_vmem [thread:$0]  %s7, 2048, %s68, [#allocation9], 128, 128, 8
    $region33: #{tpu_custom_call.1} parent=1 // pred_fallthru
      _
    // Predicated region
    $region34: #{tpu_custom_call.1} parent=1 // pred_check
      _
    $region35: #{tpu_custom_call.1} parent=1 // pred_check_branch
      %75 = sbr.rel (0) target = $region37
    $region36: #{tpu_custom_call.1} parent=1 // pred_region
      _
    $region37: #{tpu_custom_call.1} parent=1 // pred_fallthru
      _
    // Predicated region
    $region38: #{tpu_custom_call.1} parent=1 // pred_check
      _
    $region39: #{tpu_custom_call.1} parent=1 // pred_check_branch
      %77 = sbr.rel (0) target = $region41
    $region40: #{tpu_custom_call.1} parent=1 // pred_region
      %s79 = ssub.s32 2048, 2048
      %80 = vsyncadd [#allocation9], %s79
      %s81 = sshll.u32 [#allocation10], 4
      %s82 = int_to_ptr.vmem [resolvable:$true] %s81
      %87 = dma.hbm_to_vmem [thread:$0]  %s9, 2048, %s82, [#allocation9], 128, 128, 8
    $region41: #{tpu_custom_call.1} parent=1 // pred_fallthru
      _
    // Predicated region
    $region42: #{tpu_custom_call.1} parent=1 // pred_check
      _
    $region43: #{tpu_custom_call.1} parent=1 // pred_check_branch
      %89 = sbr.rel (0) target = $region45
    $region44: #{tpu_custom_call.1} parent=1 // pred_region
      %s91 = ssub.s32 2048, 2048
      %92 = vsyncadd [#allocation12], %s91
      %s93 = sshll.u32 [#allocation11], 4
      %s94 = int_to_ptr.vmem [resolvable:$true] %s93
      %99 = dma.hbm_to_vmem [thread:$0]  %s10, 2048, %s94, [#allocation12], 128, 128, 8
    $region45: #{tpu_custom_call.1} parent=1 // pred_fallthru
      _
    // Predicated region
    $region46: #{tpu_custom_call.1} parent=1 // pred_check
      _
    $region47: #{tpu_custom_call.1} parent=1 // pred_check_branch
      %101 = sbr.rel (0) target = $region49
    $region48: #{tpu_custom_call.1} parent=1 // pred_region
      _
    $region49: #{tpu_custom_call.1} parent=1 // pred_fallthru
      _
    // Predicated region
    $region50: #{tpu_custom_call.1} parent=1 // pred_check
      _
    $region51: #{tpu_custom_call.1} parent=1 // pred_check_branch
      %103 = sbr.rel (0) target = $region53
    $region52: #{tpu_custom_call.1} parent=1 // pred_region
      %104 = dma.done [#allocation3], 128
    $region53: #{tpu_custom_call.1} parent=1 // pred_fallthru
      _
    // Predicated region
    $region54: #{tpu_custom_call.1} parent=1 // pred_check
      _
    $region55: #{tpu_custom_call.1} parent=1 // pred_check_branch
      %106 = sbr.rel (0) target = $region57
    $region56: #{tpu_custom_call.1} parent=1 // pred_region
      %107 = dma.done [#allocation6], 128
    $region57: #{tpu_custom_call.1} parent=1 // pred_fallthru
      _
    // Predicated region
    $region58: #{tpu_custom_call.1} parent=1 // pred_check
      _
    $region59: #{tpu_custom_call.1} parent=1 // pred_check_branch
      %109 = sbr.rel (0) target = $region61
    $region60: #{tpu_custom_call.1} parent=1 // pred_region
      %110 = dma.done [#allocation6], 2048
    $region61: #{tpu_custom_call.1} parent=1 // pred_fallthru
      _
    // Predicated region
    $region62: #{tpu_custom_call.1} parent=1 // pred_check
      _
    $region63: #{tpu_custom_call.1} parent=1 // pred_check_branch
      %112 = sbr.rel (0) target = $region65
    $region64: #{tpu_custom_call.1} parent=1 // pred_region
      %113 = dma.done [#allocation9], 2048
    $region65: #{tpu_custom_call.1} parent=1 // pred_fallthru
      _
    // Predicated region
    $region66: #{tpu_custom_call.1} parent=1 // pred_check
      _
    $region67: #{tpu_custom_call.1} parent=1 // pred_check_branch
      %115 = sbr.rel (0) target = $region69
    $region68: #{tpu_custom_call.1} parent=1 // pred_region
      %116 = dma.done [#allocation9], 2048
    $region69: #{tpu_custom_call.1} parent=1 // pred_fallthru
      _
    // Predicated region
    $region70: #{tpu_custom_call.1} parent=1 // pred_check
      _
    $region71: #{tpu_custom_call.1} parent=1 // pred_check_branch
      %118 = sbr.rel (0) target = $region73
    $region72: #{tpu_custom_call.1} parent=1 // pred_region
      %119 = dma.done [#allocation12], 2048
    $region73: #{tpu_custom_call.1} parent=1 // pred_fallthru
      _
    %v120 = vld [vmem:[#allocation2] sm:$0xff]
    %v121 = vld [vmem:[%s2] sm:$0xff]
    %v122 = vld [vmem:[%s2 + $0x8] sm:$0xff]
    %v123 = vld [vmem:[%s1] sm:$0xff]
    %v124 = vld [vmem:[#allocation5] sm:$0xff]
    %v126 = vcombine.high %v124, %v124
    %vm127 = vcmask 31744
    %v129 = vsel %vm127, %v123, 0
    %vm131 = vcmask 1043456
    %v132 = vsel %vm131, %v124, 0
    %v134 = vsel %vm131, %v126, 0
    %136 = vmatprep.subr.mxu0 %v134
    %137 = vmatpush1.msra.mxu0 %v132
    %138 = vmatprep.subr.mxu0 0.0
    %139 = vmatpush1.msra.mxu0 0.0
    %140 = vmatprep.subr.mxu0 0.0
    %141 = vmatpush1.msra.mxu0 0.0
    %142 = vmatprep.subr.mxu0 0.0
    %143 = vmatpush1.msra.mxu0 0.0
    %144 = vmatprep.subr.mxu0 0.0
    %145 = vmatpush1.msra.mxu0 0.0
    %146 = vmatprep.subr.mxu0 0.0
    %147 = vmatpush1.msra.mxu0 0.0
    %148 = vmatprep.subr.mxu0 0.0
    %149 = vmatpush1.msra.mxu0 0.0
    %150 = vmatprep.subr.mxu0 0.0
    %151 = vmatpush1.msra.mxu0 0.0
    %152 = vmatprep.subr.mxu0 0.0
    %153 = vmatpush1.msra.mxu0 0.0
    %154 = vmatprep.subr.mxu0 0.0
    %155 = vmatpush1.msra.mxu0 0.0
    %156 = vmatprep.subr.mxu0 0.0
    %157 = vmatpush1.msra.mxu0 0.0
    %158 = vmatprep.subr.mxu0 0.0
    %159 = vmatpush1.msra.mxu0 0.0
    %160 = vmatprep.subr.mxu0 0.0
    %161 = vmatpush1.msra.mxu0 0.0
    %162 = vmatprep.subr.mxu0 0.0
    %163 = vmatpush1.msra.mxu0 0.0
    %164 = vmatprep.subr.mxu0 0.0
    %165 = vmatpush1.msra.mxu0 0.0
    %166 = vmatprep.subr.mxu0 0.0
    %167 = vmatpush1.msra.mxu0 0.0
    %168 = vmatprep.subr.mxu0 0.0
    %169 = vmatpush1.msra.mxu0 0.0
    %170 = vmatprep.subr.mxu0 0.0
    %171 = vmatpush1.msra.mxu0 0.0
    %172 = vmatprep.subr.mxu0 0.0
    %173 = vmatpush1.msra.mxu0 0.0
    %174 = vmatprep.subr.mxu0 0.0
    %175 = vmatpush1.msra.mxu0 0.0
    %176 = vmatprep.subr.mxu0 0.0
    %177 = vmatpush1.msra.mxu0 0.0
    %178 = vmatprep.subr.mxu0 0.0
    %179 = vmatpush1.msra.mxu0 0.0
    %180 = vmatprep.subr.mxu0 0.0
    %181 = vmatpush1.msra.mxu0 0.0
    %182 = vmatprep.subr.mxu0 0.0
    %183 = vmatpush1.msra.mxu0 0.0
    %184 = vmatprep.subr.mxu0 0.0
    %185 = vmatpush1.msra.mxu0 0.0
    %186 = vmatprep.subr.mxu0 0.0
    %187 = vmatpush1.msra.mxu0 0.0
    %188 = vmatprep.subr.mxu0 0.0
    %189 = vmatpush1.msra.mxu0 0.0
    %190 = vmatprep.subr.mxu0 0.0
    %191 = vmatpush1.msra.mxu0 0.0
    %192 = vmatprep.subr.mxu0 0.0
    %193 = vmatpush1.msra.mxu0 0.0
    %194 = vmatprep.subr.mxu0 0.0
    %195 = vmatpush1.msra.mxu0 0.0
    %196 = vmatprep.subr.mxu0 0.0
    %197 = vmatpush1.msra.mxu0 0.0
    %198 = vmatprep.subr.mxu0 0.0
    %199 = vmatpush1.msra.mxu0 0.0
    %200 = vmatprep.mubr.f32.mxu0 0.0
    %201 = vmatmul.mubr.f32.gmra.mrb[0].mxu0 %v129
    %v202 = vpop.f32.mrb[0].mxu0
    %v203 = vadd.f32 0.0, %v202
    %v204 = vpop.f32.mrb[0].mxu0
    %v205 = vadd.f32 0.0, %v204
    %206 = vdwg.mxu0
    %vm207 = vcmask 64512
    %v209 = vsel %vm207, %v120, 0
    %211 = vmatprep.subr.mxu0 %v122
    %212 = vmatpush1.msra.mxu0 %v121
    %213 = vmatprep.subr.mxu0 0.0
    %214 = vmatpush1.msra.mxu0 0.0
    %215 = vmatprep.subr.mxu0 0.0
    %216 = vmatpush1.msra.mxu0 0.0
    %217 = vmatprep.subr.mxu0 0.0
    %218 = vmatpush1.msra.mxu0 0.0
    %219 = vmatprep.subr.mxu0 0.0
    %220 = vmatpush1.msra.mxu0 0.0
    %221 = vmatprep.subr.mxu0 0.0
    %222 = vmatpush1.msra.mxu0 0.0
    %223 = vmatprep.subr.mxu0 0.0
    %224 = vmatpush1.msra.mxu0 0.0
    %225 = vmatprep.subr.mxu0 0.0
    %226 = vmatpush1.msra.mxu0 0.0
    %227 = vmatprep.subr.mxu0 0.0
    %228 = vmatpush1.msra.mxu0 0.0
    %229 = vmatprep.subr.mxu0 0.0
    %230 = vmatpush1.msra.mxu0 0.0
    %231 = vmatprep.subr.mxu0 0.0
    %232 = vmatpush1.msra.mxu0 0.0
    %233 = vmatprep.subr.mxu0 0.0
    %234 = vmatpush1.msra.mxu0 0.0
    %235 = vmatprep.subr.mxu0 0.0
    %236 = vmatpush1.msra.mxu0 0.0
    %237 = vmatprep.subr.mxu0 0.0
    %238 = vmatpush1.msra.mxu0 0.0
    %239 = vmatprep.subr.mxu0 0.0
    %240 = vmatpush1.msra.mxu0 0.0
    %241 = vmatprep.subr.mxu0 0.0
    %242 = vmatpush1.msra.mxu0 0.0
    %243 = vmatprep.subr.mxu0 0.0
    %244 = vmatpush1.msra.mxu0 0.0
    %245 = vmatprep.subr.mxu0 0.0
    %246 = vmatpush1.msra.mxu0 0.0
    %247 = vmatprep.subr.mxu0 0.0
    %248 = vmatpush1.msra.mxu0 0.0
    %249 = vmatprep.subr.mxu0 0.0
    %250 = vmatpush1.msra.mxu0 0.0
    %251 = vmatprep.subr.mxu0 0.0
    %252 = vmatpush1.msra.mxu0 0.0
    %253 = vmatprep.subr.mxu0 0.0
    %254 = vmatpush1.msra.mxu0 0.0
    %255 = vmatprep.subr.mxu0 0.0
    %256 = vmatpush1.msra.mxu0 0.0
    %257 = vmatprep.subr.mxu0 0.0
    %258 = vmatpush1.msra.mxu0 0.0
    %259 = vmatprep.subr.mxu0 0.0
    %260 = vmatpush1.msra.mxu0 0.0
    %261 = vmatprep.subr.mxu0 0.0
    %262 = vmatpush1.msra.mxu0 0.0
    %263 = vmatprep.subr.mxu0 0.0
    %264 = vmatpush1.msra.mxu0 0.0
    %265 = vmatprep.subr.mxu0 0.0
    %266 = vmatpush1.msra.mxu0 0.0
    %267 = vmatprep.subr.mxu0 0.0
    %268 = vmatpush1.msra.mxu0 0.0
    %269 = vmatprep.subr.mxu0 0.0
    %270 = vmatpush1.msra.mxu0 0.0
    %271 = vmatprep.subr.mxu0 0.0
    %272 = vmatpush1.msra.mxu0 0.0
    %273 = vmatprep.subr.mxu0 0.0
    %274 = vmatpush1.msra.mxu0 0.0
    %275 = vmatprep.mubr.f32.mxu0 0.0
    %276 = vmatmul.mubr.f32.gmra.mrb[0].mxu0 %v209
    %v277 = vpop.f32.mrb[0].mxu0
    %v278 = vadd.f32 %v203, %v277
    %v279 = vpop.f32.mrb[0].mxu0
    %v280 = vadd.f32 %v205, %v279
    %281 = vdwg.mxu0
    %v282 = vld [vmem:[%s4] sm:$0x3]
    %v284 = vlaneseq
    %v285 = vshrl.u32 %v284, 7
    %v286 = vsub.s32 0, %v285
    %v287 = vrot.slane %v282, %v286
    %v288 = vlaneseq
    %v289 = vshrl.u32 %v288, 7
    %v290 = vsub.s32 1, %v289
    %v291 = vrot.slane %v282, %v290
    %v294 = vadd.f32 %v278, %v287
    %v295 = vadd.f32 %v280, %v291
    %v296 = vmax.f32 %v294, 0.0
    %v297 = vmax.f32 %v295, 0.0
    %v298 = vld [vmem:[#allocation7] sm:$0xff]
    %v299 = vld [vmem:[#allocation7 + $0x8] sm:$0xff]
    %v300 = vld [vmem:[#allocation7 + $0x10] sm:$0xff]
    %v301 = vld [vmem:[#allocation7 + $0x18] sm:$0xff]
    %v302 = vld [vmem:[#allocation7 + $0x20] sm:$0xff]
    %v303 = vld [vmem:[#allocation7 + $0x28] sm:$0xff]
    %v304 = vld [vmem:[#allocation7 + $0x30] sm:$0xff]
    %v305 = vld [vmem:[#allocation7 + $0x38] sm:$0xff]
    %v306 = vld [vmem:[#allocation7 + $0x40] sm:$0xff]
    %v307 = vld [vmem:[#allocation7 + $0x48] sm:$0xff]
    %v308 = vld [vmem:[#allocation7 + $0x50] sm:$0xff]
    %v309 = vld [vmem:[#allocation7 + $0x58] sm:$0xff]
    %v310 = vld [vmem:[#allocation7 + $0x60] sm:$0xff]
    %v311 = vld [vmem:[#allocation7 + $0x68] sm:$0xff]
    %v312 = vld [vmem:[#allocation7 + $0x70] sm:$0xff]
    %v313 = vld [vmem:[#allocation7 + $0x78] sm:$0xff]
    %v314 = vld [vmem:[%s6] sm:$0x1]
    %v316 = vlaneseq
    %v317 = vshrl.u32 %v316, 7
    %v318 = vsub.s32 0, %v317
    %v319 = vrot.slane %v314, %v318
    %321 = vmatprep.subr.mxu0 0.0
    %322 = vmatpush1.msra.mxu0 %v298
    %323 = vmatprep.subr.mxu0 0.0
    %324 = vmatpush1.msra.mxu0 %v299
    %325 = vmatprep.subr.mxu0 0.0
    %326 = vmatpush1.msra.mxu0 %v300
    %327 = vmatprep.subr.mxu0 0.0
    %328 = vmatpush1.msra.mxu0 %v301
    %329 = vmatprep.subr.mxu0 0.0
    %330 = vmatpush1.msra.mxu0 %v302
    %331 = vmatprep.subr.mxu0 0.0
    %332 = vmatpush1.msra.mxu0 %v303
    %333 = vmatprep.subr.mxu0 0.0
    %334 = vmatpush1.msra.mxu0 %v304
    %335 = vmatprep.subr.mxu0 0.0
    %336 = vmatpush1.msra.mxu0 %v305
    %337 = vmatprep.subr.mxu0 0.0
    %338 = vmatpush1.msra.mxu0 %v306
    %339 = vmatprep.subr.mxu0 0.0
    %340 = vmatpush1.msra.mxu0 %v307
    %341 = vmatprep.subr.mxu0 0.0
    %342 = vmatpush1.msra.mxu0 %v308
    %343 = vmatprep.subr.mxu0 0.0
    %344 = vmatpush1.msra.mxu0 %v309
    %345 = vmatprep.subr.mxu0 0.0
    %346 = vmatpush1.msra.mxu0 %v310
    %347 = vmatprep.subr.mxu0 0.0
    %348 = vmatpush1.msra.mxu0 %v311
    %349 = vmatprep.subr.mxu0 0.0
    %350 = vmatpush1.msra.mxu0 %v312
    %351 = vmatprep.subr.mxu0 0.0
    %352 = vmatpush1.msra.mxu0 %v313
    %353 = vmatprep.subr.mxu0 0.0
    %354 = vmatpush1.msra.mxu0 0.0
    %355 = vmatprep.subr.mxu0 0.0
    %356 = vmatpush1.msra.mxu0 0.0
    %357 = vmatprep.subr.mxu0 0.0
    %358 = vmatpush1.msra.mxu0 0.0
    %359 = vmatprep.subr.mxu0 0.0
    %360 = vmatpush1.msra.mxu0 0.0
    %361 = vmatprep.subr.mxu0 0.0
    %362 = vmatpush1.msra.mxu0 0.0
    %363 = vmatprep.subr.mxu0 0.0
    %364 = vmatpush1.msra.mxu0 0.0
    %365 = vmatprep.subr.mxu0 0.0
    %366 = vmatpush1.msra.mxu0 0.0
    %367 = vmatprep.subr.mxu0 0.0
    %368 = vmatpush1.msra.mxu0 0.0
    %369 = vmatprep.subr.mxu0 0.0
    %370 = vmatpush1.msra.mxu0 0.0
    %371 = vmatprep.subr.mxu0 0.0
    %372 = vmatpush1.msra.mxu0 0.0
    %373 = vmatprep.subr.mxu0 0.0
    %374 = vmatpush1.msra.mxu0 0.0
    %375 = vmatprep.subr.mxu0 0.0
    %376 = vmatpush1.msra.mxu0 0.0
    %377 = vmatprep.subr.mxu0 0.0
    %378 = vmatpush1.msra.mxu0 0.0
    %379 = vmatprep.subr.mxu0 0.0
    %380 = vmatpush1.msra.mxu0 0.0
    %381 = vmatprep.subr.mxu0 0.0
    %382 = vmatpush1.msra.mxu0 0.0
    %383 = vmatprep.subr.mxu0 0.0
    %384 = vmatpush1.msra.mxu0 0.0
    %385 = vmatprep.mubr.f32.mxu0 0.0
    %386 = vmatmul.mubr.f32.gmra.mrb[0].mxu0 %v296
    %v387 = vpop.f32.mrb[0].mxu0
    %v388 = vadd.f32 %v319, %v387
    %v389 = vpop.f32.mrb[0].mxu0
    %390 = vdwg.mxu0
    %v391 = vmax.f32 %v388, 0.0
    %v392 = vld [vmem:[#allocation8] sm:$0xff]
    %v393 = vld [vmem:[#allocation8 + $0x8] sm:$0xff]
    %v394 = vld [vmem:[#allocation8 + $0x10] sm:$0xff]
    %v395 = vld [vmem:[#allocation8 + $0x18] sm:$0xff]
    %v396 = vld [vmem:[#allocation8 + $0x20] sm:$0xff]
    %v397 = vld [vmem:[#allocation8 + $0x28] sm:$0xff]
    %v398 = vld [vmem:[#allocation8 + $0x30] sm:$0xff]
    %v399 = vld [vmem:[#allocation8 + $0x38] sm:$0xff]
    %v400 = vld [vmem:[#allocation8 + $0x40] sm:$0xff]
    %v401 = vld [vmem:[#allocation8 + $0x48] sm:$0xff]
    %v402 = vld [vmem:[#allocation8 + $0x50] sm:$0xff]
    %v403 = vld [vmem:[#allocation8 + $0x58] sm:$0xff]
    %v404 = vld [vmem:[#allocation8 + $0x60] sm:$0xff]
    %v405 = vld [vmem:[#allocation8 + $0x68] sm:$0xff]
    %v406 = vld [vmem:[#allocation8 + $0x70] sm:$0xff]
    %v407 = vld [vmem:[#allocation8 + $0x78] sm:$0xff]
    %v408 = vld [vmem:[%s8] sm:$0x1]
    %v410 = vlaneseq
    %v411 = vshrl.u32 %v410, 7
    %v412 = vsub.s32 0, %v411
    %v413 = vrot.slane %v408, %v412
    %415 = vmatprep.subr.mxu0 0.0
    %416 = vmatpush1.msra.mxu0 %v392
    %417 = vmatprep.subr.mxu0 0.0
    %418 = vmatpush1.msra.mxu0 %v393
    %419 = vmatprep.subr.mxu0 0.0
    %420 = vmatpush1.msra.mxu0 %v394
    %421 = vmatprep.subr.mxu0 0.0
    %422 = vmatpush1.msra.mxu0 %v395
    %423 = vmatprep.subr.mxu0 0.0
    %424 = vmatpush1.msra.mxu0 %v396
    %425 = vmatprep.subr.mxu0 0.0
    %426 = vmatpush1.msra.mxu0 %v397
    %427 = vmatprep.subr.mxu0 0.0
    %428 = vmatpush1.msra.mxu0 %v398
    %429 = vmatprep.subr.mxu0 0.0
    %430 = vmatpush1.msra.mxu0 %v399
    %431 = vmatprep.subr.mxu0 0.0
    %432 = vmatpush1.msra.mxu0 %v400
    %433 = vmatprep.subr.mxu0 0.0
    %434 = vmatpush1.msra.mxu0 %v401
    %435 = vmatprep.subr.mxu0 0.0
    %436 = vmatpush1.msra.mxu0 %v402
    %437 = vmatprep.subr.mxu0 0.0
    %438 = vmatpush1.msra.mxu0 %v403
    %439 = vmatprep.subr.mxu0 0.0
    %440 = vmatpush1.msra.mxu0 %v404
    %441 = vmatprep.subr.mxu0 0.0
    %442 = vmatpush1.msra.mxu0 %v405
    %443 = vmatprep.subr.mxu0 0.0
    %444 = vmatpush1.msra.mxu0 %v406
    %445 = vmatprep.subr.mxu0 0.0
    %446 = vmatpush1.msra.mxu0 %v407
    %447 = vmatprep.subr.mxu0 0.0
    %448 = vmatpush1.msra.mxu0 0.0
    %449 = vmatprep.subr.mxu0 0.0
    %450 = vmatpush1.msra.mxu0 0.0
    %451 = vmatprep.subr.mxu0 0.0
    %452 = vmatpush1.msra.mxu0 0.0
    %453 = vmatprep.subr.mxu0 0.0
    %454 = vmatpush1.msra.mxu0 0.0
    %455 = vmatprep.subr.mxu0 0.0
    %456 = vmatpush1.msra.mxu0 0.0
    %457 = vmatprep.subr.mxu0 0.0
    %458 = vmatpush1.msra.mxu0 0.0
    %459 = vmatprep.subr.mxu0 0.0
    %460 = vmatpush1.msra.mxu0 0.0
    %461 = vmatprep.subr.mxu0 0.0
    %462 = vmatpush1.msra.mxu0 0.0
    %463 = vmatprep.subr.mxu0 0.0
    %464 = vmatpush1.msra.mxu0 0.0
    %465 = vmatprep.subr.mxu0 0.0
    %466 = vmatpush1.msra.mxu0 0.0
    %467 = vmatprep.subr.mxu0 0.0
    %468 = vmatpush1.msra.mxu0 0.0
    %469 = vmatprep.subr.mxu0 0.0
    %470 = vmatpush1.msra.mxu0 0.0
    %471 = vmatprep.subr.mxu0 0.0
    %472 = vmatpush1.msra.mxu0 0.0
    %473 = vmatprep.subr.mxu0 0.0
    %474 = vmatpush1.msra.mxu0 0.0
    %475 = vmatprep.subr.mxu0 0.0
    %476 = vmatpush1.msra.mxu0 0.0
    %477 = vmatprep.subr.mxu0 0.0
    %478 = vmatpush1.msra.mxu0 0.0
    %479 = vmatprep.mubr.f32.mxu0 0.0
    %480 = vmatmul.mubr.f32.gmra.mrb[0].mxu0 %v297
    %v481 = vpop.f32.mrb[0].mxu0
    %v482 = vadd.f32 %v413, %v481
    %v483 = vpop.f32.mrb[0].mxu0
    %484 = vdwg.mxu0
    %v485 = vmax.f32 %v482, 0.0
    %v486 = vld [vmem:[#allocation10] sm:$0xff]
    %v487 = vld [vmem:[#allocation10 + $0x8] sm:$0xff]
    %v488 = vld [vmem:[#allocation10 + $0x10] sm:$0xff]
    %v489 = vld [vmem:[#allocation10 + $0x18] sm:$0xff]
    %v490 = vld [vmem:[#allocation10 + $0x20] sm:$0xff]
    %v491 = vld [vmem:[#allocation10 + $0x28] sm:$0xff]
    %v492 = vld [vmem:[#allocation10 + $0x30] sm:$0xff]
    %v493 = vld [vmem:[#allocation10 + $0x38] sm:$0xff]
    %v494 = vld [vmem:[#allocation10 + $0x40] sm:$0xff]
    %v495 = vld [vmem:[#allocation10 + $0x48] sm:$0xff]
    %v496 = vld [vmem:[#allocation10 + $0x50] sm:$0xff]
    %v497 = vld [vmem:[#allocation10 + $0x58] sm:$0xff]
    %v498 = vld [vmem:[#allocation10 + $0x60] sm:$0xff]
    %v499 = vld [vmem:[#allocation10 + $0x68] sm:$0xff]
    %v500 = vld [vmem:[#allocation10 + $0x70] sm:$0xff]
    %v501 = vld [vmem:[#allocation10 + $0x78] sm:$0xff]
    %v502 = vld [vmem:[#allocation11] sm:$0xff]
    %v503 = vld [vmem:[#allocation11 + $0x8] sm:$0xff]
    %v504 = vld [vmem:[#allocation11 + $0x10] sm:$0xff]
    %v505 = vld [vmem:[#allocation11 + $0x18] sm:$0xff]
    %v506 = vld [vmem:[#allocation11 + $0x20] sm:$0xff]
    %v507 = vld [vmem:[#allocation11 + $0x28] sm:$0xff]
    %v508 = vld [vmem:[#allocation11 + $0x30] sm:$0xff]
    %v509 = vld [vmem:[#allocation11 + $0x38] sm:$0xff]
    %v510 = vld [vmem:[#allocation11 + $0x40] sm:$0xff]
    %v511 = vld [vmem:[#allocation11 + $0x48] sm:$0xff]
    %v512 = vld [vmem:[#allocation11 + $0x50] sm:$0xff]
    %v513 = vld [vmem:[#allocation11 + $0x58] sm:$0xff]
    %v514 = vld [vmem:[#allocation11 + $0x60] sm:$0xff]
    %v515 = vld [vmem:[#allocation11 + $0x68] sm:$0xff]
    %v516 = vld [vmem:[#allocation11 + $0x70] sm:$0xff]
    %v517 = vld [vmem:[#allocation11 + $0x78] sm:$0xff]
    %518 = vmatprep.subr.mxu0 0.0
    %519 = vmatpush1.msra.mxu0 %v502
    %520 = vmatprep.subr.mxu0 0.0
    %521 = vmatpush1.msra.mxu0 %v503
    %522 = vmatprep.subr.mxu0 0.0
    %523 = vmatpush1.msra.mxu0 %v504
    %524 = vmatprep.subr.mxu0 0.0
    %525 = vmatpush1.msra.mxu0 %v505
    %526 = vmatprep.subr.mxu0 0.0
    %527 = vmatpush1.msra.mxu0 %v506
    %528 = vmatprep.subr.mxu0 0.0
    %529 = vmatpush1.msra.mxu0 %v507
    %530 = vmatprep.subr.mxu0 0.0
    %531 = vmatpush1.msra.mxu0 %v508
    %532 = vmatprep.subr.mxu0 0.0
    %533 = vmatpush1.msra.mxu0 %v509
    %534 = vmatprep.subr.mxu0 0.0
    %535 = vmatpush1.msra.mxu0 %v510
    %536 = vmatprep.subr.mxu0 0.0
    %537 = vmatpush1.msra.mxu0 %v511
    %538 = vmatprep.subr.mxu0 0.0
    %539 = vmatpush1.msra.mxu0 %v512
    %540 = vmatprep.subr.mxu0 0.0
    %541 = vmatpush1.msra.mxu0 %v513
    %542 = vmatprep.subr.mxu0 0.0
    %543 = vmatpush1.msra.mxu0 %v514
    %544 = vmatprep.subr.mxu0 0.0
    %545 = vmatpush1.msra.mxu0 %v515
    %546 = vmatprep.subr.mxu0 0.0
    %547 = vmatpush1.msra.mxu0 %v516
    %548 = vmatprep.subr.mxu0 0.0
    %549 = vmatpush1.msra.mxu0 %v517
    %550 = vmatprep.subr.mxu0 0.0
    %551 = vmatpush1.msra.mxu0 0.0
    %552 = vmatprep.subr.mxu0 0.0
    %553 = vmatpush1.msra.mxu0 0.0
    %554 = vmatprep.subr.mxu0 0.0
    %555 = vmatpush1.msra.mxu0 0.0
    %556 = vmatprep.subr.mxu0 0.0
    %557 = vmatpush1.msra.mxu0 0.0
    %558 = vmatprep.subr.mxu0 0.0
    %559 = vmatpush1.msra.mxu0 0.0
    %560 = vmatprep.subr.mxu0 0.0
    %561 = vmatpush1.msra.mxu0 0.0
    %562 = vmatprep.subr.mxu0 0.0
    %563 = vmatpush1.msra.mxu0 0.0
    %564 = vmatprep.subr.mxu0 0.0
    %565 = vmatpush1.msra.mxu0 0.0
    %566 = vmatprep.subr.mxu0 0.0
    %567 = vmatpush1.msra.mxu0 0.0
    %568 = vmatprep.subr.mxu0 0.0
    %569 = vmatpush1.msra.mxu0 0.0
    %570 = vmatprep.subr.mxu0 0.0
    %571 = vmatpush1.msra.mxu0 0.0
    %572 = vmatprep.subr.mxu0 0.0
    %573 = vmatpush1.msra.mxu0 0.0
    %574 = vmatprep.subr.mxu0 0.0
    %575 = vmatpush1.msra.mxu0 0.0
    %576 = vmatprep.subr.mxu0 0.0
    %577 = vmatpush1.msra.mxu0 0.0
    %578 = vmatprep.subr.mxu0 0.0
    %579 = vmatpush1.msra.mxu0 0.0
    %580 = vmatprep.subr.mxu0 0.0
    %581 = vmatpush1.msra.mxu0 0.0
    %582 = vmatprep.mubr.f32.mxu0 0.0
    %583 = vmatmul.mubr.f32.gmra.mrb[0].mxu0 %v485
    %v584 = vpop.f32.mrb[0].mxu0
    %v585 = vadd.f32 0.0, %v584
    %v586 = vpop.f32.mrb[0].mxu0
    %587 = vdwg.mxu0
    %588 = vmatprep.subr.mxu0 0.0
    %589 = vmatpush1.msra.mxu0 %v486
    %590 = vmatprep.subr.mxu0 0.0
    %591 = vmatpush1.msra.mxu0 %v487
    %592 = vmatprep.subr.mxu0 0.0
    %593 = vmatpush1.msra.mxu0 %v488
    %594 = vmatprep.subr.mxu0 0.0
    %595 = vmatpush1.msra.mxu0 %v489
    %596 = vmatprep.subr.mxu0 0.0
    %597 = vmatpush1.msra.mxu0 %v490
    %598 = vmatprep.subr.mxu0 0.0
    %599 = vmatpush1.msra.mxu0 %v491
    %600 = vmatprep.subr.mxu0 0.0
    %601 = vmatpush1.msra.mxu0 %v492
    %602 = vmatprep.subr.mxu0 0.0
    %603 = vmatpush1.msra.mxu0 %v493
    %604 = vmatprep.subr.mxu0 0.0
    %605 = vmatpush1.msra.mxu0 %v494
    %606 = vmatprep.subr.mxu0 0.0
    %607 = vmatpush1.msra.mxu0 %v495
    %608 = vmatprep.subr.mxu0 0.0
    %609 = vmatpush1.msra.mxu0 %v496
    %610 = vmatprep.subr.mxu0 0.0
    %611 = vmatpush1.msra.mxu0 %v497
    %612 = vmatprep.subr.mxu0 0.0
    %613 = vmatpush1.msra.mxu0 %v498
    %614 = vmatprep.subr.mxu0 0.0
    %615 = vmatpush1.msra.mxu0 %v499
    %616 = vmatprep.subr.mxu0 0.0
    %617 = vmatpush1.msra.mxu0 %v500
    %618 = vmatprep.subr.mxu0 0.0
    %619 = vmatpush1.msra.mxu0 %v501
    %620 = vmatprep.subr.mxu0 0.0
    %621 = vmatpush1.msra.mxu0 0.0
    %622 = vmatprep.subr.mxu0 0.0
    %623 = vmatpush1.msra.mxu0 0.0
    %624 = vmatprep.subr.mxu0 0.0
    %625 = vmatpush1.msra.mxu0 0.0
    %626 = vmatprep.subr.mxu0 0.0
    %627 = vmatpush1.msra.mxu0 0.0
    %628 = vmatprep.subr.mxu0 0.0
    %629 = vmatpush1.msra.mxu0 0.0
    %630 = vmatprep.subr.mxu0 0.0
    %631 = vmatpush1.msra.mxu0 0.0
    %632 = vmatprep.subr.mxu0 0.0
    %633 = vmatpush1.msra.mxu0 0.0
    %634 = vmatprep.subr.mxu0 0.0
    %635 = vmatpush1.msra.mxu0 0.0
    %636 = vmatprep.subr.mxu0 0.0
    %637 = vmatpush1.msra.mxu0 0.0
    %638 = vmatprep.subr.mxu0 0.0
    %639 = vmatpush1.msra.mxu0 0.0
    %640 = vmatprep.subr.mxu0 0.0
    %641 = vmatpush1.msra.mxu0 0.0
    %642 = vmatprep.subr.mxu0 0.0
    %643 = vmatpush1.msra.mxu0 0.0
    %644 = vmatprep.subr.mxu0 0.0
    %645 = vmatpush1.msra.mxu0 0.0
    %646 = vmatprep.subr.mxu0 0.0
    %647 = vmatpush1.msra.mxu0 0.0
    %648 = vmatprep.subr.mxu0 0.0
    %649 = vmatpush1.msra.mxu0 0.0
    %650 = vmatprep.subr.mxu0 0.0
    %651 = vmatpush1.msra.mxu0 0.0
    %652 = vmatprep.mubr.f32.mxu0 0.0
    %653 = vmatmul.mubr.f32.gmra.mrb[0].mxu0 %v391
    %v654 = vpop.f32.mrb[0].mxu0
    %v655 = vadd.f32 %v585, %v654
    %v656 = vpop.f32.mrb[0].mxu0
    %657 = vdwg.mxu0
    %v658 = vld [vmem:[%s11] sm:$0x1]
    %v660 = vlaneseq
    %v661 = vshrl.u32 %v660, 7
    %v662 = vsub.s32 0, %v661
    %v663 = vrot.slane %v658, %v662
    %v665 = vadd.f32 %v655, %v663
    %666 = vst [vmem:[#allocation13] sm:$0xff] %v665
    // Predicated region
    $region74: #{tpu_custom_call.1} parent=1 // pred_check
      _
    $region75: #{tpu_custom_call.1} parent=1 // pred_check_branch
      %668 = sbr.rel (0) target = $region77
    $region76: #{tpu_custom_call.1} parent=1 // pred_region
      %s670 = ssub.s32 128, 128
      %671 = vsyncadd [#allocation4], %s670
      %s673 = sshll.u32 [#allocation13], 4
      %s674 = int_to_ptr.vmem [resolvable:$true] %s673
      %676 = dma.vmem_to_hbm [thread:$0]  %s674, 128, %s12, [#allocation4]
    $region77: #{tpu_custom_call.1} parent=1 // pred_fallthru
      _
    // Predicated region
    $region78: #{tpu_custom_call.1} parent=1 // pred_check
      _
    $region79: #{tpu_custom_call.1} parent=1 // pred_check_branch
      %678 = sbr.rel (0) target = $region81
    $region80: #{tpu_custom_call.1} parent=1 // pred_region
      %679 = dma.done [#allocation4], 128
    $region81: #{tpu_custom_call.1} parent=1 // pred_fallthru
      _
    %680 = vsyncpa [#allocation3], 1
    %681 = vsyncpa [#allocation6], 1
    %682 = vsyncpa [#allocation9], 1
    %683 = vsyncpa [#allocation12], 1
    %684 = vsyncpa [#allocation4], 1

</llo_original>
